<compile_context>
chip_gen: v5e
topology: v5e:2x2
jax: 0.10.0
libtpu: 0.0.40
codegen_flags: <defaults>
</compile_context>

<pallas_src>
import functools

import jax
import jax.numpy as jnp
import numpy as np
from jax.experimental import pallas as pl
from jax.experimental.pallas import tpu as pltpu


def _round_up(x, m):
    return (x + m - 1) // m * m


def _dense_conv_kernel(x_ref, w1_ref, b1_ref, w2_ref, b2_ref, o_ref, *, slope):
    # x_ref: (TL, Cin_p)   w1: (Cin_p, Cout_p)   b1: (1, Cout_p)
    # w2: (Cout_p, Cout_p) b2: (1, Cout_p)       o_ref: (TL, Cout_p)
    x = x_ref[...].astype(jnp.float32)
    a1 = jnp.where(x >= 0, x, slope * x)                       # leaky_relu (VPU)
    h = jnp.dot(a1, w1_ref[...],
                preferred_element_type=jnp.float32) + b1_ref[...]
    a2 = jnp.where(h >= 0, h, slope * h)                       # leaky_relu (VPU)
    y = jnp.dot(a2, w2_ref[...],
                preferred_element_type=jnp.float32) + b2_ref[...]
    o_ref[...] = y.astype(o_ref.dtype)


def dense_conv(x_ncl, w1, b1, w2, b2, *, slope=0.01, block_l=256):
    """DenseConv forward.

    x_ncl: (N, C_in, L)  PyTorch layout.
    w1: (C_out, C_in), b1: (C_out,)    -- conv1.weight[:, :, 0], conv1.bias
    w2: (C_out, C_out), b2: (C_out,)   -- conv2.weight[:, :, 0], conv2.bias
    returns (N, C_out, L).
    """
    N, C_in, L = x_ncl.shape
    C_out = w1.shape[0]

    # Lane / sublane aligned padded sizes.
    cin_p = _round_up(C_in, 128)
    cout_p = _round_up(C_out, 128)
    tl = min(block_l, _round_up(L, 8))          # time tile (multiple of 8)
    l_p = _round_up(L, tl)

    # Channels-last + zero padding (exact, see header comment).
    x = jnp.transpose(x_ncl, (0, 2, 1))                               # (N, L, C_in)
    x = jnp.pad(x, ((0, 0), (0, l_p - L), (0, cin_p - C_in)))
    w1_p = jnp.pad(jnp.transpose(w1), ((0, cin_p - C_in), (0, cout_p - C_out)))
    w2_p = jnp.pad(jnp.transpose(w2), ((0, cout_p - C_out), (0, cout_p - C_out)))
    b1_p = jnp.pad(b1, (0, cout_p - C_out))[None, :]
    b2_p = jnp.pad(b2, (0, cout_p - C_out))[None, :]

    kernel = functools.partial(_dense_conv_kernel, slope=slope)

    out = pl.pallas_call(
        kernel,
        out_shape=jax.ShapeDtypeStruct((N, l_p, cout_p), x_ncl.dtype),
        grid=(N, l_p // tl),
        in_specs=[
            pl.BlockSpec((None, tl, cin_p), lambda n, l: (n, l, 0)),   # x tile
            pl.BlockSpec((cin_p, cout_p), lambda n, l: (0, 0)),        # w1 (resident)
            pl.BlockSpec((1, cout_p), lambda n, l: (0, 0)),            # b1
            pl.BlockSpec((cout_p, cout_p), lambda n, l: (0, 0)),       # w2 (resident)
            pl.BlockSpec((1, cout_p), lambda n, l: (0, 0)),            # b2
        ],
        out_specs=pl.BlockSpec((None, tl, cout_p), lambda n, l: (n, l, 0)),
        compiler_params=pltpu.CompilerParams(
            dimension_semantics=("parallel", "parallel")),
    )(x, w1_p, b1_p, w2_p, b2_p)

    # Strip padding, back to PyTorch (N, C_out, L).
    return jnp.transpose(out[:, :L, :C_out], (0, 2, 1))


def dense_conv_ref(x_ncl, w1, b1, w2, b2, slope=0.01):
    """Pure-JAX reference of the PyTorch forward (high precision matmuls)."""
    def lrelu(v):
        return jnp.where(v >= 0, v, slope * v)
    hp = jax.lax.Precision.HIGHEST
    h = jnp.einsum("oc,ncl->nol", w1, lrelu(x_ncl),
                   precision=hp) + b1[None, :, None]
    y = jnp.einsum("oc,ncl->nol", w2, lrelu(h),
                   precision=hp) + b2[None, :, None]
    return y


if __name__ == "__main__":
    key = jax.random.PRNGKey(0)

    # (N, C_in, C_out, L): one deliberately unaligned small case (exercises the
    # channel/time padding path) and one lane-aligned case.
    for (N, C_in, C_out, L) in [(2, 24, 40, 100), (2, 128, 128, 512)]:
        kx, k1, k2, k3, k4, key = jax.random.split(key, 6)
        x = jax.random.normal(kx, (N, C_in, L), jnp.float32)
        w1 = jax.random.normal(k1, (C_out, C_in), jnp.float32) * 0.3
        b1 = jax.random.normal(k2, (C_out,), jnp.float32) * 0.3
        w2 = jax.random.normal(k3, (C_out, C_out), jnp.float32) * 0.3
        b2 = jax.random.normal(k4, (C_out,), jnp.float32) * 0.3

        out = jax.block_until_ready(dense_conv(x, w1, b1, w2, b2))
        assert out.shape == (N, C_out, L)

        ref = dense_conv_ref(x, w1, b1, w2, b2)
        np.testing.assert_allclose(np.asarray(out), np.asarray(ref),
                                   rtol=1e-2, atol=1e-2)

    print("KERNEL_OK")
</pallas_src>

<mosaic_0001>
module attributes {stable_mosaic.version = 11 : i64} {
  func.func @_dense_conv_kernel(%arg0: i32, %arg1: i32, %arg2: memref<1x104x128xf32, #tpu.memory_space<vmem>>, %arg3: memref<128x128xf32, #tpu.memory_space<vmem>>, %arg4: memref<1x128xf32, #tpu.memory_space<vmem>>, %arg5: memref<128x128xf32, #tpu.memory_space<vmem>>, %arg6: memref<1x128xf32, #tpu.memory_space<vmem>>, %arg7: memref<1x104x128xf32, #tpu.memory_space<vmem>>) attributes {dimension_semantics = [#tpu.dimension_semantics<parallel>, #tpu.dimension_semantics<parallel>], iteration_bounds = array<i64: 2, 1>, scalar_prefetch = 0 : i64, scratch_operands = 0 : i64, tpu.core_type = #tpu.core_type<tc>, window_params = [{transform_indices = @transform_0, window_bounds = array<i64: 1, 104, 128>}, {pipeline_mode = #tpu.pipeline_mode<synchronous>, transform_indices = @transform_1, window_bounds = array<i64: 128, 128>}, {pipeline_mode = #tpu.pipeline_mode<synchronous>, transform_indices = @transform_2, window_bounds = array<i64: 1, 128>}, {pipeline_mode = #tpu.pipeline_mode<synchronous>, transform_indices = @transform_3, window_bounds = array<i64: 128, 128>}, {pipeline_mode = #tpu.pipeline_mode<synchronous>, transform_indices = @transform_4, window_bounds = array<i64: 1, 128>}, {transform_indices = @transform_5, window_bounds = array<i64: 1, 104, 128>}]} {
    %c0 = arith.constant 0 : index
    %c0_0 = arith.constant 0 : index
    %c0_1 = arith.constant 0 : index
    %0 = vector.load %arg2[%c0, %c0_0, %c0_1] : memref<1x104x128xf32, #tpu.memory_space<vmem>>, vector<1x104x128xf32>
    %1 = vector.shape_cast %0 : vector<1x104x128xf32> to vector<104x128xf32>
    %cst = arith.constant 0.000000e+00 : f32
    %2 = vector.broadcast %cst : f32 to vector<104x128xf32>
    %3 = arith.cmpf oge, %1, %2 : vector<104x128xf32>
    %cst_2 = arith.constant 0.00999999977 : f32
    %4 = vector.broadcast %cst_2 : f32 to vector<104x128xf32>
    %5 = arith.mulf %4, %1 : vector<104x128xf32>
    %6 = arith.select %3, %1, %5 : vector<104x128xi1>, vector<104x128xf32>
    %c0_3 = arith.constant 0 : index
    %c0_4 = arith.constant 0 : index
    %7 = vector.load %arg3[%c0_3, %c0_4] : memref<128x128xf32, #tpu.memory_space<vmem>>, vector<128x128xf32>
    %cst_5 = arith.constant dense<0.000000e+00> : vector<104x128xf32>
    %8 = tpu.matmul %6, %7, %cst_5 {dimension_numbers = #tpu.dot_dimension_numbers<[1], [0], [0], [1], [0, 0, 1, 1], [], []>} : vector<104x128xf32>, vector<128x128xf32>, vector<104x128xf32> -> vector<104x128xf32>
    %c0_6 = arith.constant 0 : index
    %c0_7 = arith.constant 0 : index
    %9 = vector.load %arg4[%c0_6, %c0_7] : memref<1x128xf32, #tpu.memory_space<vmem>>, vector<1x128xf32>
    %10 = vector.broadcast %9 : vector<1x128xf32> to vector<104x128xf32>
    %11 = arith.addf %8, %10 : vector<104x128xf32>
    %cst_8 = arith.constant 0.000000e+00 : f32
    %12 = vector.broadcast %cst_8 : f32 to vector<104x128xf32>
    %13 = arith.cmpf oge, %11, %12 : vector<104x128xf32>
    %cst_9 = arith.constant 0.00999999977 : f32
    %14 = vector.broadcast %cst_9 : f32 to vector<104x128xf32>
    %15 = arith.mulf %14, %11 : vector<104x128xf32>
    %16 = arith.select %13, %11, %15 : vector<104x128xi1>, vector<104x128xf32>
    %c0_10 = arith.constant 0 : index
    %c0_11 = arith.constant 0 : index
    %17 = vector.load %arg5[%c0_10, %c0_11] : memref<128x128xf32, #tpu.memory_space<vmem>>, vector<128x128xf32>
    %cst_12 = arith.constant dense<0.000000e+00> : vector<104x128xf32>
    %18 = tpu.matmul %16, %17, %cst_12 {dimension_numbers = #tpu.dot_dimension_numbers<[1], [0], [0], [1], [0, 0, 1, 1], [], []>} : vector<104x128xf32>, vector<128x128xf32>, vector<104x128xf32> -> vector<104x128xf32>
    %c0_13 = arith.constant 0 : index
    %c0_14 = arith.constant 0 : index
    %19 = vector.load %arg6[%c0_13, %c0_14] : memref<1x128xf32, #tpu.memory_space<vmem>>, vector<1x128xf32>
    %20 = vector.broadcast %19 : vector<1x128xf32> to vector<104x128xf32>
    %21 = arith.addf %18, %20 : vector<104x128xf32>
    %c0_15 = arith.constant 0 : index
    %c0_16 = arith.constant 0 : index
    %c0_17 = arith.constant 0 : index
    %22 = vector.load %arg7[%c0_15, %c0_16, %c0_17] : memref<1x104x128xf32, #tpu.memory_space<vmem>>, vector<1x104x128xf32>
    %23 = vector.shape_cast %22 : vector<1x104x128xf32> to vector<104x128xf32>
    %24 = vector.shape_cast %21 : vector<104x128xf32> to vector<1x104x128xf32>
    tpu.vector_store %arg7[%c0_15, %c0_16, %c0_17], %24 {strides = array<i32>} : memref<1x104x128xf32, #tpu.memory_space<vmem>>, vector<1x104x128xf32>,
    return
  }
  func.func @transform_0(%arg0: i32, %arg1: i32) -> (i32, i32, i32) {
    %c0_i32 = arith.constant 0 : i32
    %c0_i32_0 = arith.constant 0 : i32
    return %arg0, %arg1, %c0_i32 : i32, i32, i32
  }
  func.func @transform_1(%arg0: i32, %arg1: i32) -> (i32, i32) {
    %c0_i32 = arith.constant 0 : i32
    %c0_i32_0 = arith.constant 0 : i32
    %c0_i32_1 = arith.constant 0 : i32
    return %c0_i32, %c0_i32_0 : i32, i32
  }
  func.func @transform_2(%arg0: i32, %arg1: i32) -> (i32, i32) {
    %c0_i32 = arith.constant 0 : i32
    %c0_i32_0 = arith.constant 0 : i32
    %c0_i32_1 = arith.constant 0 : i32
    return %c0_i32, %c0_i32_0 : i32, i32
  }
  func.func @transform_3(%arg0: i32, %arg1: i32) -> (i32, i32) {
    %c0_i32 = arith.constant 0 : i32
    %c0_i32_0 = arith.constant 0 : i32
    %c0_i32_1 = arith.constant 0 : i32
    return %c0_i32, %c0_i32_0 : i32, i32
  }
  func.func @transform_4(%arg0: i32, %arg1: i32) -> (i32, i32) {
    %c0_i32 = arith.constant 0 : i32
    %c0_i32_0 = arith.constant 0 : i32
    %c0_i32_1 = arith.constant 0 : i32
    return %c0_i32, %c0_i32_0 : i32, i32
  }
  func.func @transform_5(%arg0: i32, %arg1: i32) -> (i32, i32, i32) {
    %c0_i32 = arith.constant 0 : i32
    %c0_i32_0 = arith.constant 0 : i32
    return %arg0, %arg1, %c0_i32 : i32, i32, i32
  }
}

</mosaic_0001>

<llo_original>
// kernel: tpu_custom_call.1
$region0: #{tpu_custom_call.1}
  #allocation0 [shape = 'u32[]', space=smem, size = 0x4, offset = 0x4, fixed_abs, tag = 'smem constant byte address 0x4 - core index']
  #allocation1 [shape = 'u32[72,128]{1,0:T(1,128)}', space=vmem, size = 0x9000, scoped, tag = 'internal scratch']
  %s0 = inlined_call_operand.hbm [shape: f32[2,104,128], index: 0, kind: input, shape index: {}]
  %s1 = inlined_call_operand.hbm [shape: f32[128,128], index: 1, kind: input, shape index: {}]
  %s2 = inlined_call_operand.vmem [shape: f32[1,128], index: 2, kind: input, shape index: {}]
  %s3 = inlined_call_operand.hbm [shape: f32[128,128], index: 3, kind: input, shape index: {}]
  %s4 = inlined_call_operand.vmem [shape: f32[1,128], index: 4, kind: input, shape index: {}]
  %s5 = inlined_call_operand.hbm [shape: f32[2,104,128], index: 5, kind: output, shape index: {}]
  %s6 = sld [smem:[#allocation0]]
  $region65: #{tpu_custom_call.1} parent=0
    _
  %s8 = ssub.s32 1, %s6
  %s9 = scalar_select 0, %s8, %s6
  $region1: #{tpu_custom_call.1} parent=0
    #allocation2 [shape = 'u8[106496]{0}', space=vmem, size = 0x1a000, scoped, tag = 'input window, operand 0']
    #allocation3 [shape = 's32[2]{0}', space=sflag, size = 0x8, scoped, tag = 'scoped memory for tpu_custom_call.1']
    #allocation4 [shape = 's32[2]{0}', space=sflag, size = 0x8, scoped, tag = 'scoped memory for tpu_custom_call.1']
    #allocation5 [shape = 'u8[65536]{0}', space=vmem, size = 0x10000, scoped, tag = 'input window, operand 1, single buffered']
    #allocation6 [shape = 's32[1]{0}', space=sflag, size = 0x4, scoped, tag = 'scoped memory for tpu_custom_call.1']
    #allocation7 [shape = 'u8[65536]{0}', space=vmem, size = 0x10000, scoped, tag = 'input window, operand 3, single buffered']
    #allocation8 [shape = 'u8[106496]{0}', space=vmem, size = 0x1a000, scoped, tag = 'output window, operand 0']
    %10 = vsyncpa [#allocation3], 0
    %s11 = scalar_lea.sflag [#allocation3], 1
    %12 = vsyncpa %s11, 0
    %13 = vsyncpa [#allocation6], 0
    %14 = vsyncpa [#allocation4], 0
    %s15 = scalar_lea.sflag [#allocation4], 1
    %16 = vsyncpa %s15, 0
    loop: start=0, step=1, limit=4
    $region2: #{tpu_custom_call.1} parent=1 // loop_pre_header
      _
    $region3: #{tpu_custom_call.1} parent=1 // loop_header
      %s18 = sphi 0, %s22
      %p19 = scmp.ge.s32.totalorder %s18, 4
      %s25 = sphi 0, %s37
      %s26 = sphi 0, %s33
      %s27 = sphi 0, %s25
      %s28 = sphi 0, %s26
      %s29 = sphi 0, %s27
      %s30 = sphi 0, %s28
      %s42 = sphi 0, %s44
      %s45 = sphi 0, %s42
      %s46 = sphi 0, %s45
      %s62 = sphi 0, %s46
      %s66 = sphi 0, %s66
      %s68 = sphi 0, %s66
      %s69 = sphi 0, %s68
      %s83 = sphi 0, %s69
      %s87 = sphi 0, %s87
      %s89 = sphi 0, %s87
      %s90 = sphi 0, %s89
      %s104 = sphi 0, %s90
      %s108 = sphi 0, %s108
      %s110 = sphi 0, %s108
      %s111 = sphi 0, %s110
      %s125 = sphi 0, %s111
      %s129 = sphi 0, %s129
      %s131 = sphi 0, %s129
      %s132 = sphi 0, %s131
      %s146 = sphi 0, %s132
      %s154 = sphi 0, %s156
      %s157 = sphi 0, %s154
      %s158 = sphi 0, %s157
      %s174 = sphi 0, %s158
    $region4: #{tpu_custom_call.1} parent=1 // loop_header_branch
      %21 = sbr.rel (%p19) target = $region8
    $region5: #{tpu_custom_call.1} parent=1 // loop_body
      %s23 = ssub.s32 %s18, 1
      %s24 = ssub.s32 %s18, 2
      %s31 = sadd.s32 1, %s26
      %p32 = scmp.ge.s32.totalorder %s31, 1
      %s33 = scalar_select %p32, 0, %s31
      %s34 = sadd.s32 1, %s25
      %s35 = scalar_select %p32, %s34, %s25
      %p36 = scmp.ge.s32.totalorder %s35, 2
      %s37 = scalar_select %p36, 0, %s35
      %s38 = ssub.s32 %s25, %s37
      %s39 = ssub.s32 %s26, %s33
      %s40 = sor.u32 %s38, %s39
      %p41 = scmp.eq.s32.totalorder %s40, 0
      %s43 = sadd.s32 %s42, 1
      %s44 = scalar_select %p41, %s42, %s43
      %p47 = pneg %p41
      %p48 = scmp.eq.s32.totalorder %s18, 1
      %p49 = por %p47, %p48
      %p50 = scmp.ne.s32.totalorder %s42, %s45
      %p51 = scmp.eq.s32.totalorder %s18, 0
      %p52 = por %p50, %p51
      %p53 = scmp.ne.s32.totalorder %s42, %s45
      %p54 = scmp.eq.s32.totalorder %s23, 1
      %p55 = por %p53, %p54
      %p56 = scmp.ne.s32.totalorder %s45, %s46
      %p57 = scmp.eq.s32.totalorder %s23, 0
      %p58 = por %p56, %p57
      %p59 = scmp.ne.s32.totalorder %s45, %s46
      %p60 = scmp.eq.s32.totalorder %s24, 1
      %p61 = por %p59, %p60
      %p63 = scmp.ne.s32.totalorder %s46, %s62
      %p64 = scmp.eq.s32.totalorder %s24, 0
      %p65 = por %p63, %p64
      %s67 = sadd.s32 %s66, 1
      %p70 = scmp.eq.s32.totalorder %s18, 1
      %p71 = scmp.ne.s32.totalorder %s66, %s68
      %p72 = scmp.eq.s32.totalorder %s18, 0
      %p73 = por %p71, %p72
      %p74 = scmp.ne.s32.totalorder %s66, %s68
      %p75 = scmp.eq.s32.totalorder %s23, 1
      %p76 = por %p74, %p75
      %p77 = scmp.ne.s32.totalorder %s68, %s69
      %p78 = scmp.eq.s32.totalorder %s23, 0
      %p79 = por %p77, %p78
      %p80 = scmp.ne.s32.totalorder %s68, %s69
      %p81 = scmp.eq.s32.totalorder %s24, 1
      %p82 = por %p80, %p81
      %p84 = scmp.ne.s32.totalorder %s69, %s83
      %p85 = scmp.eq.s32.totalorder %s24, 0
      %p86 = por %p84, %p85
      %s88 = sadd.s32 %s87, 1
      %p91 = scmp.eq.s32.totalorder %s18, 1
      %p92 = scmp.ne.s32.totalorder %s87, %s89
      %p93 = scmp.eq.s32.totalorder %s18, 0
      %p94 = por %p92, %p93
      %p95 = scmp.ne.s32.totalorder %s87, %s89
      %p96 = scmp.eq.s32.totalorder %s23, 1
      %p97 = por %p95, %p96
      %p98 = scmp.ne.s32.totalorder %s89, %s90
      %p99 = scmp.eq.s32.totalorder %s23, 0
      %p100 = por %p98, %p99
      %p101 = scmp.ne.s32.totalorder %s89, %s90
      %p102 = scmp.eq.s32.totalorder %s24, 1
      %p103 = por %p101, %p102
      %p105 = scmp.ne.s32.totalorder %s90, %s104
      %p106 = scmp.eq.s32.totalorder %s24, 0
      %p107 = por %p105, %p106
      %s109 = sadd.s32 %s108, 1
      %p112 = scmp.eq.s32.totalorder %s18, 1
      %p113 = scmp.ne.s32.totalorder %s108, %s110
      %p114 = scmp.eq.s32.totalorder %s18, 0
      %p115 = por %p113, %p114
      %p116 = scmp.ne.s32.totalorder %s108, %s110
      %p117 = scmp.eq.s32.totalorder %s23, 1
      %p118 = por %p116, %p117
      %p119 = scmp.ne.s32.totalorder %s110, %s111
      %p120 = scmp.eq.s32.totalorder %s23, 0
      %p121 = por %p119, %p120
      %p122 = scmp.ne.s32.totalorder %s110, %s111
      %p123 = scmp.eq.s32.totalorder %s24, 1
      %p124 = por %p122, %p123
      %p126 = scmp.ne.s32.totalorder %s111, %s125
      %p127 = scmp.eq.s32.totalorder %s24, 0
      %p128 = por %p126, %p127
      %s130 = sadd.s32 %s129, 1
      %p133 = scmp.eq.s32.totalorder %s18, 1
      %p134 = scmp.ne.s32.totalorder %s129, %s131
      %p135 = scmp.eq.s32.totalorder %s18, 0
      %p136 = por %p134, %p135
      %p137 = scmp.ne.s32.totalorder %s129, %s131
      %p138 = scmp.eq.s32.totalorder %s23, 1
      %p139 = por %p137, %p138
      %p140 = scmp.ne.s32.totalorder %s131, %s132
      %p141 = scmp.eq.s32.totalorder %s23, 0
      %p142 = por %p140, %p141
      %p143 = scmp.ne.s32.totalorder %s131, %s132
      %p144 = scmp.eq.s32.totalorder %s24, 1
      %p145 = por %p143, %p144
      %p147 = scmp.ne.s32.totalorder %s132, %s146
      %p148 = scmp.eq.s32.totalorder %s24, 0
      %p149 = por %p147, %p148
      %s150 = ssub.s32 %s25, %s37
      %s151 = ssub.s32 %s26, %s33
      %s152 = sor.u32 %s150, %s151
      %p153 = scmp.eq.s32.totalorder %s152, 0
      %s155 = sadd.s32 %s154, 1
      %s156 = scalar_select %p153, %s154, %s155
      %p159 = pneg %p153
      %p160 = scmp.eq.s32.totalorder %s18, 1
      %p161 = por %p159, %p160
      %p162 = scmp.ne.s32.totalorder %s154, %s157
      %p163 = scmp.eq.s32.totalorder %s18, 0
      %p164 = por %p162, %p163
      %p165 = scmp.ne.s32.totalorder %s154, %s157
      %p166 = scmp.eq.s32.totalorder %s23, 1
      %p167 = por %p165, %p166
      %p168 = scmp.ne.s32.totalorder %s157, %s158
      %p169 = scmp.eq.s32.totalorder %s23, 0
      %p170 = por %p168, %p169
      %p171 = scmp.ne.s32.totalorder %s157, %s158
      %p172 = scmp.eq.s32.totalorder %s24, 1
      %p173 = por %p171, %p172
      %p175 = scmp.ne.s32.totalorder %s158, %s174
      %p176 = scmp.eq.s32.totalorder %s24, 0
      %p177 = por %p175, %p176
      %p178 = scmp.le.s32.totalorder 1, %s18
      %p179 = scmp.lt.s32.totalorder %s18, 3
      %p180 = pnand %p178, %p179
      %p181 = pneg %p180
      // Predicated region
      $region9: #{tpu_custom_call.1} parent=5 // pred_check
        _
      $region10: #{tpu_custom_call.1} parent=5 // pred_check_branch
        %183 = sbr.rel (%p180) target = $region12
      $region11: #{tpu_custom_call.1} parent=5 // pred_region
        %s184 = ssub.s32 %s18, 1
        // Predicated region
        $region13: #{tpu_custom_call.1} parent=11 // pred_check
          %p185 = pneg %p79
        $region14: #{tpu_custom_call.1} parent=11 // pred_check_branch
          %187 = sbr.rel (%p185) target = $region16
        $region15: #{tpu_custom_call.1} parent=11 // pred_region
          %189 = vsyncadd [#allocation6], 0
          %s190 = sshll.u32 %s1, 4
          %s191 = int_to_ptr.hbm [resolvable:$true] %s190
          %s192 = sshll.u32 [#allocation5], 4
          %s193 = int_to_ptr.vmem [resolvable:$true] %s192
          %198 = dma.hbm_to_vmem [thread:$0]  %s191, 2048, %s193, [#allocation6], 128, 128, 8
        $region16: #{tpu_custom_call.1} parent=11 // pred_fallthru
          _
        // Predicated region
        $region17: #{tpu_custom_call.1} parent=11 // pred_check
          %p199 = pneg %p100
        $region18: #{tpu_custom_call.1} parent=11 // pred_check_branch
          %201 = sbr.rel (%p199) target = $region20
        $region19: #{tpu_custom_call.1} parent=11 // pred_region
          _
        $region20: #{tpu_custom_call.1} parent=11 // pred_fallthru
          _
        // Predicated region
        $region21: #{tpu_custom_call.1} parent=11 // pred_check
          %p202 = pneg %p121
        $region22: #{tpu_custom_call.1} parent=11 // pred_check_branch
          %204 = sbr.rel (%p202) target = $region24
        $region23: #{tpu_custom_call.1} parent=11 // pred_region
          %206 = vsyncadd [#allocation6], 0
          %s207 = sshll.u32 %s3, 4
          %s208 = int_to_ptr.hbm [resolvable:$true] %s207
          %s209 = sshll.u32 [#allocation7], 4
          %s210 = int_to_ptr.vmem [resolvable:$true] %s209
          %215 = dma.hbm_to_vmem [thread:$0]  %s208, 2048, %s210, [#allocation6], 128, 128, 8
        $region24: #{tpu_custom_call.1} parent=11 // pred_fallthru
          _
        // Predicated region
        $region25: #{tpu_custom_call.1} parent=11 // pred_check
          %p216 = pneg %p142
        $region26: #{tpu_custom_call.1} parent=11 // pred_check_branch
          %218 = sbr.rel (%p216) target = $region28
        $region27: #{tpu_custom_call.1} parent=11 // pred_region
          _
        $region28: #{tpu_custom_call.1} parent=11 // pred_fallthru
          _
      $region12: #{tpu_custom_call.1} parent=5 // pred_fallthru
        _
      %p219 = scmp.lt.s32.totalorder %s18, 2
      // Predicated region
      $region29: #{tpu_custom_call.1} parent=5 // pred_check
        %p220 = pneg %p219
      $region30: #{tpu_custom_call.1} parent=5 // pred_check_branch
        %222 = sbr.rel (%p220) target = $region32
      $region31: #{tpu_custom_call.1} parent=5 // pred_region
        // Predicated region
        $region33: #{tpu_custom_call.1} parent=31 // pred_check
          %p223 = pneg %p52
        $region34: #{tpu_custom_call.1} parent=31 // pred_check_branch
          %225 = sbr.rel (%p223) target = $region36
        $region35: #{tpu_custom_call.1} parent=31 // pred_region
          %s226 = sand.u32 %s42, 1
          %s227 = scalar_lea.sflag [#allocation3], %s226
          %s228 = sand.u32 %s42, 1
          %s229 = smul.addr %s228, 104
          %s230 = scalar_lea.vmem [#allocation2], %s229
          %s231 = smul.u32 13, %s26
          %233 = vsyncadd %s227, 0
          %s234 = smul.addr %s25, 13
          %s235 = sadd.s32 %s231, %s234
          %s236 = smul.addr %s235, 8
          %s237 = scalar_lea.hbm %s0, %s236
          %s238 = sshll.u32 %s237, 4
          %s239 = int_to_ptr.hbm [resolvable:$true] %s238
          %s240 = sshll.u32 %s230, 4
          %s241 = int_to_ptr.vmem [resolvable:$true] %s240
          %246 = dma.hbm_to_vmem [thread:$0]  %s239, 1664, %s241, %s227, 128, 128, 8
        $region36: #{tpu_custom_call.1} parent=31 // pred_fallthru
          _
      $region32: #{tpu_custom_call.1} parent=5 // pred_fallthru
        _
      %p247 = scmp.le.s32.totalorder 1, %s18
      %p248 = scmp.lt.s32.totalorder %s18, 3
      %p249 = pnand %p247, %p248
      %p250 = pneg %p249
      // Predicated region
      $region37: #{tpu_custom_call.1} parent=5 // pred_check
        _
      $region38: #{tpu_custom_call.1} parent=5 // pred_check_branch
        %252 = sbr.rel (%p249) target = $region40
      $region39: #{tpu_custom_call.1} parent=5 // pred_region
        %s253 = ssub.s32 %s18, 1
        %s254 = sand.u32 %s45, 1
        %s255 = scalar_lea.sflag [#allocation3], %s254
        %s256 = sand.u32 %s45, 1
        %s257 = smul.addr %s256, 104
        %s258 = scalar_lea.vmem [#allocation2], %s257
        // Predicated region
        $region41: #{tpu_custom_call.1} parent=39 // pred_check
          %p259 = pneg %p58
        $region42: #{tpu_custom_call.1} parent=39 // pred_check_branch
          %261 = sbr.rel (%p259) target = $region44
        $region43: #{tpu_custom_call.1} parent=39 // pred_region
          %263 = dma.done %s255, 1664
        $region44: #{tpu_custom_call.1} parent=39 // pred_fallthru
          _
        // Predicated region
        $region45: #{tpu_custom_call.1} parent=39 // pred_check
          %p264 = pneg %p79
        $region46: #{tpu_custom_call.1} parent=39 // pred_check_branch
          %266 = sbr.rel (%p264) target = $region48
        $region47: #{tpu_custom_call.1} parent=39 // pred_region
          %268 = dma.done [#allocation6], 2048
        $region48: #{tpu_custom_call.1} parent=39 // pred_fallthru
          _
        // Predicated region
        $region49: #{tpu_custom_call.1} parent=39 // pred_check
          %p269 = pneg %p121
        $region50: #{tpu_custom_call.1} parent=39 // pred_check_branch
          %271 = sbr.rel (%p269) target = $region52
        $region51: #{tpu_custom_call.1} parent=39 // pred_region
          %273 = dma.done [#allocation6], 2048
        $region52: #{tpu_custom_call.1} parent=39 // pred_fallthru
          _
        %s274 = sand.u32 %s45, 1
        %s275 = scalar_lea.sflag [#allocation3], %s274
        %s276 = sand.u32 %s45, 1
        %s277 = smul.addr %s276, 104
        %s278 = scalar_lea.vmem [#allocation2], %s277
        %p279 = pneg %p58
        %p280 = pneg %p55
        %p281 = pneg %p79
        %p282 = pneg %p76
        %p283 = pneg %p100
        %p284 = pneg %p97
        %p285 = pneg %p121
        %p286 = pneg %p118
        %p287 = pneg %p142
        %p288 = pneg %p139
        %p289 = pneg %p170
        %p290 = pneg %p167
        %s291 = sand.u32 %s157, 1
        %s292 = scalar_lea.sflag [#allocation4], %s291
        %s293 = sand.u32 %s157, 1
        %s294 = smul.addr %s293, 104
        %s295 = scalar_lea.vmem [#allocation8], %s294
        %s296 = smul.u32 13, %s28
        %s297 = smul.u32 13, %s28
        %v298 = vld [vmem:[%s258] sm:$0xff]
        %v299 = vld [vmem:[%s258 + $0x8] sm:$0xff]
        %v300 = vld [vmem:[%s258 + $0x10] sm:$0xff]
        %v301 = vld [vmem:[%s258 + $0x18] sm:$0xff]
        %v302 = vld [vmem:[%s258 + $0x20] sm:$0xff]
        %v303 = vld [vmem:[%s258 + $0x28] sm:$0xff]
        %v304 = vld [vmem:[%s258 + $0x30] sm:$0xff]
        %v305 = vld [vmem:[%s258 + $0x38] sm:$0xff]
        %v306 = vld [vmem:[%s258 + $0x40] sm:$0xff]
        %v307 = vld [vmem:[%s258 + $0x48] sm:$0xff]
        %v308 = vld [vmem:[%s258 + $0x50] sm:$0xff]
        %v309 = vld [vmem:[%s258 + $0x58] sm:$0xff]
        %v310 = vld [vmem:[%s258 + $0x60] sm:$0xff]
        %vm311 = vcmp.ge.f32.partialorder %v298, 0.0
        %vm312 = vcmp.ge.f32.partialorder %v299, 0.0
        %vm313 = vcmp.ge.f32.partialorder %v300, 0.0
        %vm314 = vcmp.ge.f32.partialorder %v301, 0.0
        %vm315 = vcmp.ge.f32.partialorder %v302, 0.0
        %vm316 = vcmp.ge.f32.partialorder %v303, 0.0
        %vm317 = vcmp.ge.f32.partialorder %v304, 0.0
        %vm318 = vcmp.ge.f32.partialorder %v305, 0.0
        %vm319 = vcmp.ge.f32.partialorder %v306, 0.0
        %vm320 = vcmp.ge.f32.partialorder %v307, 0.0
        %vm321 = vcmp.ge.f32.partialorder %v308, 0.0
        %vm322 = vcmp.ge.f32.partialorder %v309, 0.0
        %vm323 = vcmp.ge.f32.partialorder %v310, 0.0
        %v324 = vmul.f32 %v298, 0.01
        %v325 = vmul.f32 %v299, 0.01
        %v326 = vmul.f32 %v300, 0.01
        %v327 = vmul.f32 %v301, 0.01
        %v328 = vmul.f32 %v302, 0.01
        %v329 = vmul.f32 %v303, 0.01
        %v330 = vmul.f32 %v304, 0.01
        %v331 = vmul.f32 %v305, 0.01
        %v332 = vmul.f32 %v306, 0.01
        %v333 = vmul.f32 %v307, 0.01
        %v334 = vmul.f32 %v308, 0.01
        %v335 = vmul.f32 %v309, 0.01
        %v336 = vmul.f32 %v310, 0.01
        %v337 = vsel %vm311, %v298, %v324
        %v338 = vsel %vm312, %v299, %v325
        %v339 = vsel %vm313, %v300, %v326
        %v340 = vsel %vm314, %v301, %v327
        %v341 = vsel %vm315, %v302, %v328
        %v342 = vsel %vm316, %v303, %v329
        %v343 = vsel %vm317, %v304, %v330
        %v344 = vsel %vm318, %v305, %v331
        %v345 = vsel %vm319, %v306, %v332
        %v346 = vsel %vm320, %v307, %v333
        %v347 = vsel %vm321, %v308, %v334
        %v348 = vsel %vm322, %v309, %v335
        %v349 = vsel %vm323, %v310, %v336
        %v350 = vld [vmem:[#allocation5] sm:$0xff]
        %v351 = vld [vmem:[#allocation5 + $0x8] sm:$0xff]
        %v352 = vld [vmem:[#allocation5 + $0x10] sm:$0xff]
        %v353 = vld [vmem:[#allocation5 + $0x18] sm:$0xff]
        %v354 = vld [vmem:[#allocation5 + $0x20] sm:$0xff]
        %v355 = vld [vmem:[#allocation5 + $0x28] sm:$0xff]
        %v356 = vld [vmem:[#allocation5 + $0x30] sm:$0xff]
        %v357 = vld [vmem:[#allocation5 + $0x38] sm:$0xff]
        %v358 = vld [vmem:[#allocation5 + $0x40] sm:$0xff]
        %v359 = vld [vmem:[#allocation5 + $0x48] sm:$0xff]
        %v360 = vld [vmem:[#allocation5 + $0x50] sm:$0xff]
        %v361 = vld [vmem:[#allocation5 + $0x58] sm:$0xff]
        %v362 = vld [vmem:[#allocation5 + $0x60] sm:$0xff]
        %v363 = vld [vmem:[#allocation5 + $0x68] sm:$0xff]
        %v364 = vld [vmem:[#allocation5 + $0x70] sm:$0xff]
        %v365 = vld [vmem:[#allocation5 + $0x78] sm:$0xff]
        %v366 = vld [vmem:[%s2] sm:$0x1]
        %v368 = vperm.slane %v366, 0
        %370 = vmatpush.msra.mxu0 %v365
        %371 = vmatpush.msra.mxu0 %v364
        %372 = vmatpush.msra.mxu0 %v363
        %373 = vmatpush.msra.mxu0 %v362
        %374 = vmatpush.msra.mxu0 %v361
        %375 = vmatpush.msra.mxu0 %v360
        %376 = vmatpush.msra.mxu0 %v359
        %377 = vmatpush.msra.mxu0 %v358
        %378 = vmatpush.msra.mxu0 %v357
        %379 = vmatpush.msra.mxu0 %v356
        %380 = vmatpush.msra.mxu0 %v355
        %381 = vmatpush.msra.mxu0 %v354
        %382 = vmatpush.msra.mxu0 %v353
        %383 = vmatpush.msra.mxu0 %v352
        %384 = vmatpush.msra.mxu0 %v351
        %385 = vmatpush.msra.mxu0 %v350
        %386 = vmatmul.f32.gmra.mxu0 %v337
        %v387 = vpop.f32.mrf.mxu0
        %v388 = vadd.f32 %v368, %v387
        %389 = vmatmul.f32.gmra.mxu0 %v338
        %v390 = vpop.f32.mrf.mxu0
        %v391 = vadd.f32 %v368, %v390
        %392 = vmatmul.f32.gmra.mxu0 %v339
        %v393 = vpop.f32.mrf.mxu0
        %v394 = vadd.f32 %v368, %v393
        %395 = vmatmul.f32.gmra.mxu0 %v340
        %v396 = vpop.f32.mrf.mxu0
        %v397 = vadd.f32 %v368, %v396
        %398 = vmatmul.f32.gmra.mxu0 %v341
        %v399 = vpop.f32.mrf.mxu0
        %v400 = vadd.f32 %v368, %v399
        %401 = vmatmul.f32.gmra.mxu0 %v342
        %v402 = vpop.f32.mrf.mxu0
        %v403 = vadd.f32 %v368, %v402
        %404 = vmatmul.f32.gmra.mxu0 %v343
        %v405 = vpop.f32.mrf.mxu0
        %v406 = vadd.f32 %v368, %v405
        %407 = vmatmul.f32.gmra.mxu0 %v344
        %v408 = vpop.f32.mrf.mxu0
        %v409 = vadd.f32 %v368, %v408
        %410 = vmatmul.f32.gmra.mxu0 %v345
        %v411 = vpop.f32.mrf.mxu0
        %v412 = vadd.f32 %v368, %v411
        %413 = vmatmul.f32.gmra.mxu0 %v346
        %v414 = vpop.f32.mrf.mxu0
        %v415 = vadd.f32 %v368, %v414
        %416 = vmatmul.f32.gmra.mxu0 %v347
        %v417 = vpop.f32.mrf.mxu0
        %v418 = vadd.f32 %v368, %v417
        %419 = vmatmul.f32.gmra.mxu0 %v348
        %v420 = vpop.f32.mrf.mxu0
        %v421 = vadd.f32 %v368, %v420
        %422 = vmatmul.f32.gmra.mxu0 %v349
        %v423 = vpop.f32.mrf.mxu0
        %v424 = vadd.f32 %v368, %v423
        %425 = vdwg.mxu0
        %vm426 = vcmp.ge.f32.partialorder %v388, 0.0
        %vm427 = vcmp.ge.f32.partialorder %v391, 0.0
        %vm428 = vcmp.ge.f32.partialorder %v394, 0.0
        %vm429 = vcmp.ge.f32.partialorder %v397, 0.0
        %vm430 = vcmp.ge.f32.partialorder %v400, 0.0
        %vm431 = vcmp.ge.f32.partialorder %v403, 0.0
        %vm432 = vcmp.ge.f32.partialorder %v406, 0.0
        %vm433 = vcmp.ge.f32.partialorder %v409, 0.0
        %vm434 = vcmp.ge.f32.partialorder %v412, 0.0
        %vm435 = vcmp.ge.f32.partialorder %v415, 0.0
        %vm436 = vcmp.ge.f32.partialorder %v418, 0.0
        %vm437 = vcmp.ge.f32.partialorder %v421, 0.0
        %vm438 = vcmp.ge.f32.partialorder %v424, 0.0
        %v439 = vmul.f32 %v388, 0.01
        %v440 = vmul.f32 %v391, 0.01
        %v441 = vmul.f32 %v394, 0.01
        %v442 = vmul.f32 %v397, 0.01
        %v443 = vmul.f32 %v400, 0.01
        %v444 = vmul.f32 %v403, 0.01
        %v445 = vmul.f32 %v406, 0.01
        %v446 = vmul.f32 %v409, 0.01
        %v447 = vmul.f32 %v412, 0.01
        %v448 = vmul.f32 %v415, 0.01
        %v449 = vmul.f32 %v418, 0.01
        %v450 = vmul.f32 %v421, 0.01
        %v451 = vmul.f32 %v424, 0.01
        %v452 = vsel %vm426, %v388, %v439
        %v453 = vsel %vm427, %v391, %v440
        %v454 = vsel %vm428, %v394, %v441
        %v455 = vsel %vm429, %v397, %v442
        %v456 = vsel %vm430, %v400, %v443
        %v457 = vsel %vm431, %v403, %v444
        %v458 = vsel %vm432, %v406, %v445
        %v459 = vsel %vm433, %v409, %v446
        %v460 = vsel %vm434, %v412, %v447
        %v461 = vsel %vm435, %v415, %v448
        %v462 = vsel %vm436, %v418, %v449
        %v463 = vsel %vm437, %v421, %v450
        %v464 = vsel %vm438, %v424, %v451
        %v465 = vld [vmem:[#allocation7] sm:$0xff]
        %v466 = vld [vmem:[#allocation7 + $0x8] sm:$0xff]
        %v467 = vld [vmem:[#allocation7 + $0x10] sm:$0xff]
        %v468 = vld [vmem:[#allocation7 + $0x18] sm:$0xff]
        %v469 = vld [vmem:[#allocation7 + $0x20] sm:$0xff]
        %v470 = vld [vmem:[#allocation7 + $0x28] sm:$0xff]
        %v471 = vld [vmem:[#allocation7 + $0x30] sm:$0xff]
        %v472 = vld [vmem:[#allocation7 + $0x38] sm:$0xff]
        %v473 = vld [vmem:[#allocation7 + $0x40] sm:$0xff]
        %v474 = vld [vmem:[#allocation7 + $0x48] sm:$0xff]
        %v475 = vld [vmem:[#allocation7 + $0x50] sm:$0xff]
        %v476 = vld [vmem:[#allocation7 + $0x58] sm:$0xff]
        %v477 = vld [vmem:[#allocation7 + $0x60] sm:$0xff]
        %v478 = vld [vmem:[#allocation7 + $0x68] sm:$0xff]
        %v479 = vld [vmem:[#allocation7 + $0x70] sm:$0xff]
        %v480 = vld [vmem:[#allocation7 + $0x78] sm:$0xff]
        %v481 = vld [vmem:[%s4] sm:$0x1]
        %v483 = vperm.slane %v481, 0
        %485 = vmatpush.msra.mxu0 %v480
        %486 = vmatpush.msra.mxu0 %v479
        %487 = vmatpush.msra.mxu0 %v478
        %488 = vmatpush.msra.mxu0 %v477
        %489 = vmatpush.msra.mxu0 %v476
        %490 = vmatpush.msra.mxu0 %v475
        %491 = vmatpush.msra.mxu0 %v474
        %492 = vmatpush.msra.mxu0 %v473
        %493 = vmatpush.msra.mxu0 %v472
        %494 = vmatpush.msra.mxu0 %v471
        %495 = vmatpush.msra.mxu0 %v470
        %496 = vmatpush.msra.mxu0 %v469
        %497 = vmatpush.msra.mxu0 %v468
        %498 = vmatpush.msra.mxu0 %v467
        %499 = vmatpush.msra.mxu0 %v466
        %500 = vmatpush.msra.mxu0 %v465
        %501 = vmatmul.f32.gmra.mxu0 %v452
        %v502 = vpop.f32.mrf.mxu0
        %v503 = vadd.f32 %v483, %v502
        %504 = vmatmul.f32.gmra.mxu0 %v453
        %v505 = vpop.f32.mrf.mxu0
        %v506 = vadd.f32 %v483, %v505
        %507 = vmatmul.f32.gmra.mxu0 %v454
        %v508 = vpop.f32.mrf.mxu0
        %v509 = vadd.f32 %v483, %v508
        %510 = vmatmul.f32.gmra.mxu0 %v455
        %v511 = vpop.f32.mrf.mxu0
        %v512 = vadd.f32 %v483, %v511
        %513 = vmatmul.f32.gmra.mxu0 %v456
        %v514 = vpop.f32.mrf.mxu0
        %v515 = vadd.f32 %v483, %v514
        %516 = vmatmul.f32.gmra.mxu0 %v457
        %v517 = vpop.f32.mrf.mxu0
        %v518 = vadd.f32 %v483, %v517
        %519 = vmatmul.f32.gmra.mxu0 %v458
        %v520 = vpop.f32.mrf.mxu0
        %v521 = vadd.f32 %v483, %v520
        %522 = vmatmul.f32.gmra.mxu0 %v459
        %v523 = vpop.f32.mrf.mxu0
        %v524 = vadd.f32 %v483, %v523
        %525 = vmatmul.f32.gmra.mxu0 %v460
        %v526 = vpop.f32.mrf.mxu0
        %v527 = vadd.f32 %v483, %v526
        %528 = vmatmul.f32.gmra.mxu0 %v461
        %v529 = vpop.f32.mrf.mxu0
        %v530 = vadd.f32 %v483, %v529
        %531 = vmatmul.f32.gmra.mxu0 %v462
        %v532 = vpop.f32.mrf.mxu0
        %v533 = vadd.f32 %v483, %v532
        %534 = vmatmul.f32.gmra.mxu0 %v463
        %v535 = vpop.f32.mrf.mxu0
        %v536 = vadd.f32 %v483, %v535
        %537 = vmatmul.f32.gmra.mxu0 %v464
        %v538 = vpop.f32.mrf.mxu0
        %v539 = vadd.f32 %v483, %v538
        %540 = vdwg.mxu0
        %541 = vst [vmem:[%s295] sm:$0xff] %v503
        %542 = vst [vmem:[%s295 + $0x8] sm:$0xff] %v506
        %543 = vst [vmem:[%s295 + $0x10] sm:$0xff] %v509
        %544 = vst [vmem:[%s295 + $0x18] sm:$0xff] %v512
        %545 = vst [vmem:[%s295 + $0x20] sm:$0xff] %v515
        %546 = vst [vmem:[%s295 + $0x28] sm:$0xff] %v518
        %547 = vst [vmem:[%s295 + $0x30] sm:$0xff] %v521
        %548 = vst [vmem:[%s295 + $0x38] sm:$0xff] %v524
        %549 = vst [vmem:[%s295 + $0x40] sm:$0xff] %v527
        %550 = vst [vmem:[%s295 + $0x48] sm:$0xff] %v530
        %551 = vst [vmem:[%s295 + $0x50] sm:$0xff] %v533
        %552 = vst [vmem:[%s295 + $0x58] sm:$0xff] %v536
        %553 = vst [vmem:[%s295 + $0x60] sm:$0xff] %v539
        %s554 = sand.u32 %s157, 1
        %s555 = scalar_lea.sflag [#allocation4], %s554
        %s556 = sand.u32 %s157, 1
        %s557 = smul.addr %s556, 104
        %s558 = scalar_lea.vmem [#allocation8], %s557
        // Predicated region
        $region53: #{tpu_custom_call.1} parent=39 // pred_check
          %p559 = pneg %p167
        $region54: #{tpu_custom_call.1} parent=39 // pred_check_branch
          %561 = sbr.rel (%p559) target = $region56
        $region55: #{tpu_custom_call.1} parent=39 // pred_region
          %s562 = smul.u32 13, %s28
          %564 = vsyncadd %s555, 0
          %s565 = smul.addr %s27, 13
          %s566 = sadd.s32 %s562, %s565
          %s567 = smul.addr %s566, 8
          %s568 = scalar_lea.hbm %s5, %s567
          %s569 = sshll.u32 %s558, 4
          %s570 = int_to_ptr.vmem [resolvable:$true] %s569
          %s571 = sshll.u32 %s568, 4
          %s572 = int_to_ptr.hbm [resolvable:$true] %s571
          %577 = dma.vmem_to_hbm [thread:$0]  %s570, 1664, %s572, %s555, 128, 128, 8
        $region56: #{tpu_custom_call.1} parent=39 // pred_fallthru
          _
      $region40: #{tpu_custom_call.1} parent=5 // pred_fallthru
        _
      %p578 = scmp.le.s32.totalorder 2, %s18
      // Predicated region
      $region57: #{tpu_custom_call.1} parent=5 // pred_check
        %p579 = pneg %p578
      $region58: #{tpu_custom_call.1} parent=5 // pred_check_branch
        %581 = sbr.rel (%p579) target = $region60
      $region59: #{tpu_custom_call.1} parent=5 // pred_region
        %s582 = ssub.s32 %s18, 2
        // Predicated region
        $region61: #{tpu_custom_call.1} parent=59 // pred_check
          %p583 = pneg %p173
        $region62: #{tpu_custom_call.1} parent=59 // pred_check_branch
          %585 = sbr.rel (%p583) target = $region64
        $region63: #{tpu_custom_call.1} parent=59 // pred_region
          %s586 = sand.u32 %s158, 1
          %s587 = scalar_lea.sflag [#allocation4], %s586
          %s588 = sand.u32 %s158, 1
          %s589 = smul.addr %s588, 104
          %s590 = scalar_lea.vmem [#allocation8], %s589
          %592 = dma.done %s587, 1664
        $region64: #{tpu_custom_call.1} parent=59 // pred_fallthru
          _
      $region60: #{tpu_custom_call.1} parent=5 // pred_fallthru
        _
    $region6: #{tpu_custom_call.1} parent=1 // loop_footer
      %s22 = sadd.s32 1, %s18
    $region7: #{tpu_custom_call.1} parent=1 // loop_footer_branch
      %17 = sbr.rel target = $region3
    $region8: #{tpu_custom_call.1} parent=1 // loop_exit
      _
    %593 = vsyncpa [#allocation3], 1
    %s594 = scalar_lea.sflag [#allocation3], 1
    %595 = vsyncpa %s594, 1
    %596 = vsyncpa [#allocation6], 1
    %597 = vsyncpa [#allocation4], 1
    %s598 = scalar_lea.sflag [#allocation4], 1
    %599 = vsyncpa %s598, 1

</llo_original>
